<compile_context>
chip_gen: v7x
topology: tpu7x:2x2x1
jax: 0.10.0
libtpu: 0.0.40
codegen_flags: <defaults>
</compile_context>

<pallas_src>
import functools

import jax
import jax.numpy as jnp
from jax.experimental import pallas as pl
from jax.experimental.pallas import tpu as pltpu


# ------------------------------ helpers ------------------------------------ #
def _round_up(x, m):
    return (x + m - 1) // m * m


def _pick_tile_m(m_pad):
    """Largest lane-dense tile (multiple of 128) that divides m_pad."""
    for t in (2048, 1024, 512, 256, 128):
        if m_pad % t == 0:
            return t
    return m_pad  # unreachable: m_pad is always a multiple of 128


# ------------------------------ Pallas kernel ------------------------------ #
def _conv4d_mxu_kernel(w_ref, slab_ref, o_ref, *, b_blk):
    """Lane-dense MXU contraction for one (batch-block, M-block) grid step.

    w_ref    : VMEM [out_ch, Kp]         weights (Kp = in_ch*k1*k2*k3*k4 [+1 bias])
    slab_ref : VMEM [b_blk, Kp, tile_m]  im2col slab block, lane-dense M
    o_ref    : VMEM [b_blk, out_ch, tile_m]
    """
    w = w_ref[...].astype(jnp.float32)
    for b in range(b_blk):                       # static unroll; b_blk is small
        acc = jnp.dot(w, slab_ref[b].astype(jnp.float32),
                      preferred_element_type=jnp.float32)
        o_ref[b] = acc.astype(o_ref.dtype)       # single lane-dense store / sample


# ------------------------------ host wrapper ------------------------------- #
def conv4d_pallas(x, k, bias_row=None):
    """x: [n, in_ch, D1..D4]; k: [in_ch, out_ch, k1..k4]; bias_row: [out_ch] or None."""
    n, in_ch, D1, D2, D3, D4 = x.shape
    k_in, out_ch, k1, k2, k3, k4 = k.shape
    assert k_in == in_ch
    o1, o2, o3, o4 = D1 - k1 + 1, D2 - k2 + 1, D3 - k3 + 1, D4 - k4 + 1
    o_sp = o1 * o2 * o3 * o4
    kk = k1 * k2 * k3 * k4
    K = in_ch * kk

    # Host-side (XLA) im2col: kk static slices -> lane-dense slab [n, K, o_sp].
    # TODO(synk): for large spatial extents build this slab inside the kernel from a
    # lane-dense x block (VMEM scratch) to avoid the kk-fold HBM expansion.
    rows = []
    for i1 in range(k1):
        for i2 in range(k2):
            for i3 in range(k3):
                for i4 in range(k4):
                    rows.append(
                        x[:, :, i1:i1 + o1, i2:i2 + o2, i3:i3 + o3, i4:i4 + o4])
    slab = jnp.stack(rows, axis=2).reshape(n, K, o_sp)      # K order: (ic, i1..i4)

    # Weights as the MXU LHS [out_ch, K], same K ordering.
    w2d = jnp.transpose(k, (1, 0, 2, 3, 4, 5)).reshape(out_ch, K).astype(jnp.float32)

    if bias_row is not None:
        # Fold per-out-channel bias into the matmul via an all-ones slab row.
        slab = jnp.concatenate([slab, jnp.ones((n, 1, o_sp), slab.dtype)], axis=1)
        w2d = jnp.concatenate(
            [w2d, bias_row.reshape(out_ch, 1).astype(jnp.float32)], axis=1)
    kp = w2d.shape[1]

    # Lane-dense M: pad o_sp up to a multiple of 128 and tile it.
    m_pad = _round_up(o_sp, 128)
    if m_pad != o_sp:
        slab = jnp.pad(slab, ((0, 0), (0, 0), (0, m_pad - o_sp)))
    tile_m = _pick_tile_m(m_pad)

    # Batch block: amortize the ~0.35us grid-step overhead, but keep >=2 grid steps
    # for megacore and a modest double-buffered footprint (v7x has 64 MiB VMEM).
    per_sample_bytes = (kp * tile_m + out_ch * tile_m) * 4
    b_blk = max(1, min(n, (4 * 1024 * 1024) // max(per_sample_bytes, 1)))
    if n >= 2:
        b_blk = min(b_blk, n // 2)
    while n % b_blk != 0:
        b_blk -= 1

    grid = (n // b_blk, m_pad // tile_m)
    kernel = functools.partial(_conv4d_mxu_kernel, b_blk=b_blk)

    flops = 2 * n * out_ch * o_sp * K
    bytes_accessed = (slab.size * slab.dtype.itemsize + w2d.size * 4
                      + n * out_ch * m_pad * x.dtype.itemsize)

    out = pl.pallas_call(
        kernel,
        out_shape=jax.ShapeDtypeStruct((n, out_ch, m_pad), x.dtype),
        grid_spec=pltpu.PrefetchScalarGridSpec(
            num_scalar_prefetch=0,
            grid=grid,
            in_specs=[
                pl.BlockSpec((out_ch, kp), lambda bi, mi: (0, 0)),          # weights
                pl.BlockSpec((b_blk, kp, tile_m), lambda bi, mi: (bi, 0, mi)),
            ],
            out_specs=pl.BlockSpec((b_blk, out_ch, tile_m),
                                   lambda bi, mi: (bi, 0, mi)),
        ),
        compiler_params=pltpu.CompilerParams(
            dimension_semantics=("parallel", "parallel"),   # megacore-friendly
            vmem_limit_bytes=32 * 1024 * 1024),              # safe on v5e/v6e/v7x
        cost_estimate=pl.CostEstimate(
            flops=flops, transcendentals=0, bytes_accessed=bytes_accessed),
    )(w2d, slab)

    out = out[:, :, :o_sp]
    return out.reshape(n, out_ch, o1, o2, o3, o4)


# ---------------------- Conv4d module (JAX port of spec) ------------------- #
class Conv4d:
    """4D valid cross-correlation (stride 1), matching the PyTorch module."""

    def __init__(self, ker_shape, in_ch, out_ch, bias=False, key=None):
        if key is None:
            key = jax.random.PRNGKey(0)
        k_key, b_key = jax.random.split(key)
        shape = (in_ch, out_ch) + tuple(ker_shape)
        fan_in = out_ch
        for d in ker_shape:
            fan_in *= d
        bound = (6.0 / fan_in) ** 0.5
        self.k = jax.random.uniform(k_key, shape, jnp.float32, -bound, bound)
        if bias:
            self.bias = jax.random.uniform(b_key, shape, jnp.float32, -bound, bound)
        else:
            self.bias = None
        self.ker_shape = tuple(ker_shape)
        self.in_ch = in_ch
        self.out_ch = out_ch

    def __call__(self, x):
        if x.shape[1] != self.k.shape[0]:
            raise ValueError('Check input channel number input:%d kernel:%d'
                             % (x.shape[1], self.k.shape[0]))
        if self.bias is not None:
            # torch forward: tensordot(ones_like(patches), bias) == per-out_ch sum
            # of bias over (in_ch, k1..k4), added at every output position.
            bias_row = jnp.sum(self.bias, axis=(0, 2, 3, 4, 5))
        else:
            bias_row = None
        return conv4d_pallas(x, self.k, bias_row)


# --------------------- pure-JAX reference (check only) --------------------- #
def _extract_patches(x, ker_shape):
    n, c, D1, D2, D3, D4 = x.shape
    k1, k2, k3, k4 = ker_shape
    o1, o2, o3, o4 = D1 - k1 + 1, D2 - k2 + 1, D3 - k3 + 1, D4 - k4 + 1
    slabs = []
    for i1 in range(k1):
        for i2 in range(k2):
            for i3 in range(k3):
                for i4 in range(k4):
                    slabs.append(
                        x[:, :, i1:i1 + o1, i2:i2 + o2, i3:i3 + o3, i4:i4 + o4])
    p = jnp.stack(slabs, axis=2)
    return p.reshape(n, c, k1, k2, k3, k4, o1, o2, o3, o4)


# --------------------------------- main ------------------------------------ #
if __name__ == "__main__":
    key = jax.random.PRNGKey(0)
    xkey, pkey, pkey_b = jax.random.split(key, 3)

    n, in_ch, out_ch = 2, 3, 4
    ker_shape = (2, 2, 2, 2)
    spatial = (5, 5, 5, 5)        # output spatial = (4, 4, 4, 4) -> o_sp = 256

    x = jax.random.normal(xkey, (n, in_ch) + spatial, dtype=jnp.float32)

    patches = _extract_patches(x, ker_shape)

    # --- bias=False path ---
    conv = Conv4d(ker_shape, in_ch, out_ch, bias=False, key=pkey)
    out = jax.block_until_ready(conv(x))
    ref = jnp.tensordot(patches, conv.k,
                        axes=([1, 2, 3, 4, 5], [0, 2, 3, 4, 5]))
    ref = ref.transpose(0, 5, 1, 2, 3, 4)
    assert out.shape == (n, out_ch, 4, 4, 4, 4), out.shape
    assert jnp.allclose(out, ref, atol=1e-4, rtol=1e-4), float(
        jnp.max(jnp.abs(out - ref)))

    # --- bias=True path (validates the bias-row fold) ---
    conv_b = Conv4d(ker_shape, in_ch, out_ch, bias=True, key=pkey_b)
    out_b = jax.block_until_ready(conv_b(x))
    ref_b = jnp.tensordot(patches, conv_b.k,
                          axes=([1, 2, 3, 4, 5], [0, 2, 3, 4, 5]))
    ref_b = ref_b.transpose(0, 5, 1, 2, 3, 4)
    bias_sum = jnp.sum(conv_b.bias, axis=(0, 2, 3, 4, 5))
    ref_b = ref_b + bias_sum[None, :, None, None, None, None]
    assert jnp.allclose(out_b, ref_b, atol=1e-4, rtol=1e-4), float(
        jnp.max(jnp.abs(out_b - ref_b)))

    print("KERNEL_OK")
</pallas_src>

<mosaic_0001>
module attributes {stable_mosaic.version = 11 : i64} {
  func.func @_conv4d_mxu_kernel(%arg0: i32, %arg1: i32, %arg2: memref<4x48xf32, #tpu.memory_space<vmem>>, %arg3: memref<1x48x256xf32, #tpu.memory_space<vmem>>, %arg4: memref<1x4x256xf32, #tpu.memory_space<vmem>>) attributes {dimension_semantics = [#tpu.dimension_semantics<parallel>, #tpu.dimension_semantics<parallel>], iteration_bounds = array<i64: 2, 1>, scalar_prefetch = 0 : i64, scratch_operands = 0 : i64, tpu.core_type = #tpu.core_type<tc>, window_params = [{pipeline_mode = #tpu.pipeline_mode<synchronous>, transform_indices = @transform_0, window_bounds = array<i64: 4, 48>}, {transform_indices = @transform_1, window_bounds = array<i64: 1, 48, 256>}, {transform_indices = @transform_2, window_bounds = array<i64: 1, 4, 256>}]} {
    %c0 = arith.constant 0 : index
    %c0_0 = arith.constant 0 : index
    %0 = vector.load %arg2[%c0, %c0_0] : memref<4x48xf32, #tpu.memory_space<vmem>>, vector<4x48xf32>
    %c0_1 = arith.constant 0 : index
    %c0_2 = arith.constant 0 : index
    %c0_3 = arith.constant 0 : index
    %1 = vector.load %arg3[%c0_1, %c0_2, %c0_3] : memref<1x48x256xf32, #tpu.memory_space<vmem>>, vector<1x48x256xf32>
    %2 = vector.shape_cast %1 : vector<1x48x256xf32> to vector<48x256xf32>
    %cst = arith.constant dense<0.000000e+00> : vector<4x256xf32>
    %3 = tpu.matmul %0, %2, %cst {dimension_numbers = #tpu.dot_dimension_numbers<[1], [0], [0], [1], [0, 0, 1, 1], [], []>} : vector<4x48xf32>, vector<48x256xf32>, vector<4x256xf32> -> vector<4x256xf32>
    %c0_4 = arith.constant 0 : index
    %c0_5 = arith.constant 0 : index
    %c0_6 = arith.constant 0 : index
    %4 = vector.load %arg4[%c0_4, %c0_5, %c0_6] : memref<1x4x256xf32, #tpu.memory_space<vmem>>, vector<1x4x256xf32>
    %5 = vector.shape_cast %4 : vector<1x4x256xf32> to vector<4x256xf32>
    %6 = vector.shape_cast %3 : vector<4x256xf32> to vector<1x4x256xf32>
    tpu.vector_store %arg4[%c0_4, %c0_5, %c0_6], %6 {strides = array<i32>} : memref<1x4x256xf32, #tpu.memory_space<vmem>>, vector<1x4x256xf32>,
    return
  }
  func.func @transform_0(%arg0: i32, %arg1: i32) -> (i32, i32) {
    %c0_i32 = arith.constant 0 : i32
    %c0_i32_0 = arith.constant 0 : i32
    %c0_i32_1 = arith.constant 0 : i32
    return %c0_i32, %c0_i32_0 : i32, i32
  }
  func.func @transform_1(%arg0: i32, %arg1: i32) -> (i32, i32, i32) {
    %c0_i32 = arith.constant 0 : i32
    %c0_i32_0 = arith.constant 0 : i32
    return %arg0, %c0_i32, %arg1 : i32, i32, i32
  }
  func.func @transform_2(%arg0: i32, %arg1: i32) -> (i32, i32, i32) {
    %c0_i32 = arith.constant 0 : i32
    %c0_i32_0 = arith.constant 0 : i32
    return %arg0, %c0_i32, %arg1 : i32, i32, i32
  }
}

</mosaic_0001>

<llo_original>
// kernel: tpu_custom_call.1
$region0: #{tpu_custom_call.1}
  #allocation0 [shape = 'u32[]', space=smem, size = 0x4, offset = 0x4, fixed_abs, tag = 'smem constant byte address 0x4 - core index']
  #allocation1 [shape = 'u32[144,128]{1,0:T(1,128)}', space=vmem, size = 0x12000, scoped, tag = 'internal scratch']
  %s0 = inlined_call_operand.hbm [shape: f32[4,48], index: 0, kind: input, shape index: {}]
  %s1 = inlined_call_operand.hbm [shape: f32[2,48,256], index: 1, kind: input, shape index: {}]
  %s2 = inlined_call_operand.hbm [shape: f32[2,4,256], index: 2, kind: output, shape index: {}]
  %s3 = sld [smem:[#allocation0]]
  $region49: #{tpu_custom_call.1} parent=0
    _
  %s5 = ssub.s32 1, %s3
  %s6 = scalar_select 0, %s5, %s3
  $region1: #{tpu_custom_call.1} parent=0
    #allocation2 [shape = 'u8[2048]{0}', space=vmem, size = 0x800, scoped, tag = 'input window, operand 0, single buffered']
    #allocation3 [shape = 's32[2]{0}', space=sflag, size = 0x8, scoped, tag = 'scoped memory for tpu_custom_call.1']
    #allocation4 [shape = 's32[2]{0}', space=sflag, size = 0x8, scoped, tag = 'scoped memory for tpu_custom_call.1']
    #allocation5 [shape = 'u8[98304]{0}', space=vmem, size = 0x18000, scoped, tag = 'input window, operand 1']
    #allocation6 [shape = 's32[2]{0}', space=sflag, size = 0x8, scoped, tag = 'scoped memory for tpu_custom_call.1']
    #allocation7 [shape = 'u8[8192]{0}', space=vmem, size = 0x2000, scoped, tag = 'output window, operand 0']
    %7 = vsyncpa [#allocation3], 0
    %8 = vsyncpa [#allocation6], 0
    %s9 = scalar_lea.sflag [#allocation6], 1
    %10 = vsyncpa %s9, 0
    %11 = vsyncpa [#allocation4], 0
    %s12 = scalar_lea.sflag [#allocation4], 1
    %13 = vsyncpa %s12, 0
    loop: start=0, step=1, limit=4
    $region2: #{tpu_custom_call.1} parent=1 // loop_pre_header
      _
    $region3: #{tpu_custom_call.1} parent=1 // loop_header
      %s15 = sphi 0, %s19
      %p16 = scmp.ge.s32.totalorder %s15, 4
      %s22 = sphi 0, %s34
      %s23 = sphi 0, %s30
      %s24 = sphi 0, %s22
      %s25 = sphi 0, %s23
      %s26 = sphi 0, %s24
      %s27 = sphi 0, %s25
      %s35 = sphi 0, %s35
      %s37 = sphi 0, %s35
      %s38 = sphi 0, %s37
      %s52 = sphi 0, %s38
      %s60 = sphi 0, %s62
      %s63 = sphi 0, %s60
      %s64 = sphi 0, %s63
      %s80 = sphi 0, %s64
      %s88 = sphi 0, %s90
      %s91 = sphi 0, %s88
      %s92 = sphi 0, %s91
      %s108 = sphi 0, %s92
    $region4: #{tpu_custom_call.1} parent=1 // loop_header_branch
      %18 = sbr.rel (%p16) target = $region8
    $region5: #{tpu_custom_call.1} parent=1 // loop_body
      %s20 = ssub.s32 %s15, 1
      %s21 = ssub.s32 %s15, 2
      %s28 = sadd.s32 1, %s23
      %p29 = scmp.ge.s32.totalorder %s28, 1
      %s30 = scalar_select %p29, 0, %s28
      %s31 = sadd.s32 1, %s22
      %s32 = scalar_select %p29, %s31, %s22
      %p33 = scmp.ge.s32.totalorder %s32, 2
      %s34 = scalar_select %p33, 0, %s32
      %s36 = sadd.s32 %s35, 1
      %p39 = scmp.eq.s32.totalorder %s15, 1
      %p40 = scmp.ne.s32.totalorder %s35, %s37
      %p41 = scmp.eq.s32.totalorder %s15, 0
      %p42 = por %p40, %p41
      %p43 = scmp.ne.s32.totalorder %s35, %s37
      %p44 = scmp.eq.s32.totalorder %s20, 1
      %p45 = por %p43, %p44
      %p46 = scmp.ne.s32.totalorder %s37, %s38
      %p47 = scmp.eq.s32.totalorder %s20, 0
      %p48 = por %p46, %p47
      %p49 = scmp.ne.s32.totalorder %s37, %s38
      %p50 = scmp.eq.s32.totalorder %s21, 1
      %p51 = por %p49, %p50
      %p53 = scmp.ne.s32.totalorder %s38, %s52
      %p54 = scmp.eq.s32.totalorder %s21, 0
      %p55 = por %p53, %p54
      %s56 = ssub.s32 %s22, %s34
      %s57 = ssub.s32 %s23, %s30
      %s58 = sor.u32 %s56, %s57
      %p59 = scmp.eq.s32.totalorder %s58, 0
      %s61 = sadd.s32 %s60, 1
      %s62 = scalar_select %p59, %s60, %s61
      %p65 = pneg %p59
      %p66 = scmp.eq.s32.totalorder %s15, 1
      %p67 = por %p65, %p66
      %p68 = scmp.ne.s32.totalorder %s60, %s63
      %p69 = scmp.eq.s32.totalorder %s15, 0
      %p70 = por %p68, %p69
      %p71 = scmp.ne.s32.totalorder %s60, %s63
      %p72 = scmp.eq.s32.totalorder %s20, 1
      %p73 = por %p71, %p72
      %p74 = scmp.ne.s32.totalorder %s63, %s64
      %p75 = scmp.eq.s32.totalorder %s20, 0
      %p76 = por %p74, %p75
      %p77 = scmp.ne.s32.totalorder %s63, %s64
      %p78 = scmp.eq.s32.totalorder %s21, 1
      %p79 = por %p77, %p78
      %p81 = scmp.ne.s32.totalorder %s64, %s80
      %p82 = scmp.eq.s32.totalorder %s21, 0
      %p83 = por %p81, %p82
      %s84 = ssub.s32 %s22, %s34
      %s85 = ssub.s32 %s23, %s30
      %s86 = sor.u32 %s84, %s85
      %p87 = scmp.eq.s32.totalorder %s86, 0
      %s89 = sadd.s32 %s88, 1
      %s90 = scalar_select %p87, %s88, %s89
      %p93 = pneg %p87
      %p94 = scmp.eq.s32.totalorder %s15, 1
      %p95 = por %p93, %p94
      %p96 = scmp.ne.s32.totalorder %s88, %s91
      %p97 = scmp.eq.s32.totalorder %s15, 0
      %p98 = por %p96, %p97
      %p99 = scmp.ne.s32.totalorder %s88, %s91
      %p100 = scmp.eq.s32.totalorder %s20, 1
      %p101 = por %p99, %p100
      %p102 = scmp.ne.s32.totalorder %s91, %s92
      %p103 = scmp.eq.s32.totalorder %s20, 0
      %p104 = por %p102, %p103
      %p105 = scmp.ne.s32.totalorder %s91, %s92
      %p106 = scmp.eq.s32.totalorder %s21, 1
      %p107 = por %p105, %p106
      %p109 = scmp.ne.s32.totalorder %s92, %s108
      %p110 = scmp.eq.s32.totalorder %s21, 0
      %p111 = por %p109, %p110
      %p112 = scmp.le.s32.totalorder 1, %s15
      %p113 = scmp.lt.s32.totalorder %s15, 3
      %p114 = pnand %p112, %p113
      %p115 = pneg %p114
      // Predicated region
      $region9: #{tpu_custom_call.1} parent=5 // pred_check
        _
      $region10: #{tpu_custom_call.1} parent=5 // pred_check_branch
        %117 = sbr.rel (%p114) target = $region12
      $region11: #{tpu_custom_call.1} parent=5 // pred_region
        %s118 = ssub.s32 %s15, 1
        // Predicated region
        $region13: #{tpu_custom_call.1} parent=11 // pred_check
          %p119 = pneg %p48
        $region14: #{tpu_custom_call.1} parent=11 // pred_check_branch
          %121 = sbr.rel (%p119) target = $region16
        $region15: #{tpu_custom_call.1} parent=11 // pred_region
          %s123 = ssub.s32 64, 64
          %124 = vsyncadd [#allocation3], %s123
          %s126 = sshll.u32 [#allocation2], 4
          %s127 = int_to_ptr.vmem [resolvable:$true] %s126
          %129 = dma.hbm_to_vmem [thread:$0]  %s0, 64, %s127, [#allocation3]
        $region16: #{tpu_custom_call.1} parent=11 // pred_fallthru
          _
      $region12: #{tpu_custom_call.1} parent=5 // pred_fallthru
        _
      %p130 = scmp.lt.s32.totalorder %s15, 2
      // Predicated region
      $region17: #{tpu_custom_call.1} parent=5 // pred_check
        %p131 = pneg %p130
      $region18: #{tpu_custom_call.1} parent=5 // pred_check_branch
        %133 = sbr.rel (%p131) target = $region20
      $region19: #{tpu_custom_call.1} parent=5 // pred_region
        // Predicated region
        $region21: #{tpu_custom_call.1} parent=19 // pred_check
          %p134 = pneg %p70
        $region22: #{tpu_custom_call.1} parent=19 // pred_check_branch
          %136 = sbr.rel (%p134) target = $region24
        $region23: #{tpu_custom_call.1} parent=19 // pred_region
          %s137 = sand.u32 %s60, 1
          %s138 = scalar_lea.sflag [#allocation6], %s137
          %s139 = sand.u32 %s60, 1
          %s140 = smul.addr %s139, 96
          %s141 = scalar_lea.vmem [#allocation5], %s140
          %s142 = smul.u32 2, %s23
          %s144 = ssub.s32 1536, 1536
          %145 = vsyncadd %s138, %s144
          %s146 = smul.addr %s22, 12
          %s147 = sadd.s32 %s142, %s146
          %s148 = smul.addr %s147, 128
          %s149 = scalar_lea.hbm %s1, %s148
          %s150 = sshll.u32 %s141, 4
          %s151 = int_to_ptr.vmem [resolvable:$true] %s150
          %156 = dma.hbm_to_vmem [thread:$0]  %s149, 1536, %s151, %s138, 256, 256, 16
        $region24: #{tpu_custom_call.1} parent=19 // pred_fallthru
          _
      $region20: #{tpu_custom_call.1} parent=5 // pred_fallthru
        _
      %p157 = scmp.le.s32.totalorder 1, %s15
      %p158 = scmp.lt.s32.totalorder %s15, 3
      %p159 = pnand %p157, %p158
      %p160 = pneg %p159
      // Predicated region
      $region25: #{tpu_custom_call.1} parent=5 // pred_check
        _
      $region26: #{tpu_custom_call.1} parent=5 // pred_check_branch
        %162 = sbr.rel (%p159) target = $region28
      $region27: #{tpu_custom_call.1} parent=5 // pred_region
        %s163 = ssub.s32 %s15, 1
        // Predicated region
        $region29: #{tpu_custom_call.1} parent=27 // pred_check
          %p164 = pneg %p48
        $region30: #{tpu_custom_call.1} parent=27 // pred_check_branch
          %166 = sbr.rel (%p164) target = $region32
        $region31: #{tpu_custom_call.1} parent=27 // pred_region
          %167 = dma.done [#allocation3], 64
        $region32: #{tpu_custom_call.1} parent=27 // pred_fallthru
          _
        %s168 = sand.u32 %s63, 1
        %s169 = scalar_lea.sflag [#allocation6], %s168
        %s170 = sand.u32 %s63, 1
        %s171 = smul.addr %s170, 96
        %s172 = scalar_lea.vmem [#allocation5], %s171
        // Predicated region
        $region33: #{tpu_custom_call.1} parent=27 // pred_check
          %p173 = pneg %p76
        $region34: #{tpu_custom_call.1} parent=27 // pred_check_branch
          %175 = sbr.rel (%p173) target = $region36
        $region35: #{tpu_custom_call.1} parent=27 // pred_region
          %176 = dma.done %s169, 1536
        $region36: #{tpu_custom_call.1} parent=27 // pred_fallthru
          _
        %p177 = pneg %p48
        %p178 = pneg %p45
        %s179 = sand.u32 %s63, 1
        %s180 = scalar_lea.sflag [#allocation6], %s179
        %s181 = sand.u32 %s63, 1
        %s182 = smul.addr %s181, 96
        %s183 = scalar_lea.vmem [#allocation5], %s182
        %p184 = pneg %p76
        %p185 = pneg %p73
        %p186 = pneg %p104
        %p187 = pneg %p101
        %s188 = sand.u32 %s91, 1
        %s189 = scalar_lea.sflag [#allocation4], %s188
        %s190 = sand.u32 %s91, 1
        %s191 = smul.addr %s190, 8
        %s192 = scalar_lea.vmem [#allocation7], %s191
        %s193 = smul.u32 2, %s25
        %s194 = smul.u32 2, %s25
        %v195 = vld [vmem:[#allocation2] sm:$0xf]
        %v196 = vld [vmem:[%s172] sm:$0xff]
        %v197 = vld [vmem:[%s172 + $0x8] sm:$0xff]
        %v198 = vld [vmem:[%s172 + $0x10] sm:$0xff]
        %v199 = vld [vmem:[%s172 + $0x18] sm:$0xff]
        %v200 = vld [vmem:[%s172 + $0x20] sm:$0xff]
        %v201 = vld [vmem:[%s172 + $0x28] sm:$0xff]
        %v202 = vld [vmem:[%s172 + $0x30] sm:$0xff]
        %v203 = vld [vmem:[%s172 + $0x38] sm:$0xff]
        %v204 = vld [vmem:[%s172 + $0x40] sm:$0xff]
        %v205 = vld [vmem:[%s172 + $0x48] sm:$0xff]
        %v206 = vld [vmem:[%s172 + $0x50] sm:$0xff]
        %v207 = vld [vmem:[%s172 + $0x58] sm:$0xff]
        %vm208 = vcmask 392192
        %v210 = vsel %vm208, %v195, 0
        %212 = vmatprep.subr.mxu0 %v197
        %213 = vmatpush1.msra.mxu0 %v196
        %214 = vmatprep.subr.mxu0 %v199
        %215 = vmatpush1.msra.mxu0 %v198
        %216 = vmatprep.subr.mxu0 %v201
        %217 = vmatpush1.msra.mxu0 %v200
        %218 = vmatprep.subr.mxu0 %v203
        %219 = vmatpush1.msra.mxu0 %v202
        %220 = vmatprep.subr.mxu0 %v205
        %221 = vmatpush1.msra.mxu0 %v204
        %222 = vmatprep.subr.mxu0 %v207
        %223 = vmatpush1.msra.mxu0 %v206
        %224 = vmatprep.subr.mxu0 0.0
        %225 = vmatpush1.msra.mxu0 0.0
        %226 = vmatprep.subr.mxu0 0.0
        %227 = vmatpush1.msra.mxu0 0.0
        %228 = vmatprep.subr.mxu0 0.0
        %229 = vmatpush1.msra.mxu0 0.0
        %230 = vmatprep.subr.mxu0 0.0
        %231 = vmatpush1.msra.mxu0 0.0
        %232 = vmatprep.subr.mxu0 0.0
        %233 = vmatpush1.msra.mxu0 0.0
        %234 = vmatprep.subr.mxu0 0.0
        %235 = vmatpush1.msra.mxu0 0.0
        %236 = vmatprep.subr.mxu0 0.0
        %237 = vmatpush1.msra.mxu0 0.0
        %238 = vmatprep.subr.mxu0 0.0
        %239 = vmatpush1.msra.mxu0 0.0
        %240 = vmatprep.subr.mxu0 0.0
        %241 = vmatpush1.msra.mxu0 0.0
        %242 = vmatprep.subr.mxu0 0.0
        %243 = vmatpush1.msra.mxu0 0.0
        %244 = vmatprep.subr.mxu0 0.0
        %245 = vmatpush1.msra.mxu0 0.0
        %246 = vmatprep.subr.mxu0 0.0
        %247 = vmatpush1.msra.mxu0 0.0
        %248 = vmatprep.subr.mxu0 0.0
        %249 = vmatpush1.msra.mxu0 0.0
        %250 = vmatprep.subr.mxu0 0.0
        %251 = vmatpush1.msra.mxu0 0.0
        %252 = vmatprep.subr.mxu0 0.0
        %253 = vmatpush1.msra.mxu0 0.0
        %254 = vmatprep.subr.mxu0 0.0
        %255 = vmatpush1.msra.mxu0 0.0
        %256 = vmatprep.subr.mxu0 0.0
        %257 = vmatpush1.msra.mxu0 0.0
        %258 = vmatprep.subr.mxu0 0.0
        %259 = vmatpush1.msra.mxu0 0.0
        %260 = vmatprep.subr.mxu0 0.0
        %261 = vmatpush1.msra.mxu0 0.0
        %262 = vmatprep.subr.mxu0 0.0
        %263 = vmatpush1.msra.mxu0 0.0
        %264 = vmatprep.subr.mxu0 0.0
        %265 = vmatpush1.msra.mxu0 0.0
        %266 = vmatprep.subr.mxu0 0.0
        %267 = vmatpush1.msra.mxu0 0.0
        %268 = vmatprep.subr.mxu0 0.0
        %269 = vmatpush1.msra.mxu0 0.0
        %270 = vmatprep.subr.mxu0 0.0
        %271 = vmatpush1.msra.mxu0 0.0
        %272 = vmatprep.subr.mxu0 0.0
        %273 = vmatpush1.msra.mxu0 0.0
        %274 = vmatprep.subr.mxu0 0.0
        %275 = vmatpush1.msra.mxu0 0.0
        %276 = vmatprep.mubr.f32.mxu0 0.0
        %277 = vmatmul.mubr.f32.gmra.mrb[0].mxu0 %v210
        %v278 = vpop.f32.mrb[0].mxu0
        %v279 = vadd.f32 0.0, %v278
        %v280 = vpop.f32.mrb[0].mxu0
        %v281 = vadd.f32 0.0, %v280
        %282 = vdwg.mxu0
        %v285 = vcombine.low %v279, %v281
        %287 = vst [vmem:[%s192] sm:$0xff] %v285
        %s288 = sand.u32 %s91, 1
        %s289 = scalar_lea.sflag [#allocation4], %s288
        %s290 = sand.u32 %s91, 1
        %s291 = smul.addr %s290, 8
        %s292 = scalar_lea.vmem [#allocation7], %s291
        // Predicated region
        $region37: #{tpu_custom_call.1} parent=27 // pred_check
          %p293 = pneg %p101
        $region38: #{tpu_custom_call.1} parent=27 // pred_check_branch
          %295 = sbr.rel (%p293) target = $region40
        $region39: #{tpu_custom_call.1} parent=27 // pred_region
          %s296 = smul.u32 2, %s25
          %s298 = ssub.s32 128, 128
          %299 = vsyncadd %s289, %s298
          %s300 = smul.addr %s24, 2
          %s301 = sadd.s32 %s296, %s300
          %s302 = smul.addr %s301, 64
          %s303 = scalar_lea.hbm %s2, %s302
          %s305 = sshll.u32 %s292, 4
          %s306 = int_to_ptr.vmem [resolvable:$true] %s305
          %308 = dma.vmem_to_hbm [thread:$0]  %s306, 128, %s303, %s289
        $region40: #{tpu_custom_call.1} parent=27 // pred_fallthru
          _
      $region28: #{tpu_custom_call.1} parent=5 // pred_fallthru
        _
      %p309 = scmp.le.s32.totalorder 2, %s15
      // Predicated region
      $region41: #{tpu_custom_call.1} parent=5 // pred_check
        %p310 = pneg %p309
      $region42: #{tpu_custom_call.1} parent=5 // pred_check_branch
        %312 = sbr.rel (%p310) target = $region44
      $region43: #{tpu_custom_call.1} parent=5 // pred_region
        %s313 = ssub.s32 %s15, 2
        // Predicated region
        $region45: #{tpu_custom_call.1} parent=43 // pred_check
          %p314 = pneg %p107
        $region46: #{tpu_custom_call.1} parent=43 // pred_check_branch
          %316 = sbr.rel (%p314) target = $region48
        $region47: #{tpu_custom_call.1} parent=43 // pred_region
          %s317 = sand.u32 %s92, 1
          %s318 = scalar_lea.sflag [#allocation4], %s317
          %s319 = sand.u32 %s92, 1
          %s320 = smul.addr %s319, 8
          %s321 = scalar_lea.vmem [#allocation7], %s320
          %322 = dma.done %s318, 128
        $region48: #{tpu_custom_call.1} parent=43 // pred_fallthru
          _
      $region44: #{tpu_custom_call.1} parent=5 // pred_fallthru
        _
    $region6: #{tpu_custom_call.1} parent=1 // loop_footer
      %s19 = sadd.s32 1, %s15
    $region7: #{tpu_custom_call.1} parent=1 // loop_footer_branch
      %14 = sbr.rel target = $region3
    $region8: #{tpu_custom_call.1} parent=1 // loop_exit
      _
    %323 = vsyncpa [#allocation3], 1
    %s324 = scalar_lea.sflag [#allocation3], 1
    %325 = vsyncpa %s324, 1
    %326 = vsyncpa [#allocation6], 1
    %s327 = scalar_lea.sflag [#allocation6], 1
    %328 = vsyncpa %s327, 1
    %329 = vsyncpa [#allocation4], 1
    %s330 = scalar_lea.sflag [#allocation4], 1
    %331 = vsyncpa %s330, 1

</llo_original>
